<compile_context>
chip_gen: v7x
topology: tpu7x:2x2x1
jax: 0.10.0
libtpu: 0.0.40
codegen_flags: <defaults>
</compile_context>

<pallas_src>
import math

import jax
import jax.numpy as jnp
from jax import lax
from jax.experimental import pallas as pl
from jax.experimental.pallas import tpu as pltpu


_LANES = 128
_SUBLANES = 8
_MAX_BLOCK_ROWS = 2048   # (2048, 128) f32 = 1 MiB per input per pipeline buffer
_PALLAS_MIN_N = 1024     # below this, fused XLA beats kernel launch overhead


def _cdiv(a: int, b: int) -> int:
    return -(-a // b)


def _round_up(a: int, b: int) -> int:
    return _cdiv(a, b) * b


def _make_qsum_kernel(block_rows: int, chunk_rows: int, block_elems: int,
                      blocks_per_part: int, n_valid: int):
    """Build the Pallas kernel with the static sizes baked in."""
    num_chunks = block_rows // chunk_rows
    groups = chunk_rows // _SUBLANES

    def kernel(phi_ref, w_ref, out_ref):
        part = pl.program_id(0)     # "parallel" axis (feeds both TCs on v7x)
        step = pl.program_id(1)     # "arbitrary" reduction axis

        @pl.when(step == 0)
        def _():
            out_ref[...] = jnp.zeros_like(out_ref)

        # Valid element count of this (un-clamped) block:
        #   >= block_elems  -> fully valid block (mask-free hot path)
        #   in (0, block_elems) -> tail / partial block (element mask)
        #   <= 0            -> overhang step of the short partition (all masked)
        raw_block = part * blocks_per_part + step
        valid = jnp.int32(n_valid) - raw_block * block_elems

        # Flat element index within a (chunk_rows, 128) chunk (loop-invariant).
        flat_iota = (
            lax.broadcasted_iota(jnp.int32, (chunk_rows, _LANES), 0) * _LANES
            + lax.broadcasted_iota(jnp.int32, (chunk_rows, _LANES), 1))

        def accumulate(use_mask: bool):
            def body(c, acc):
                r0 = pl.multiple_of(c * chunk_rows, chunk_rows)
                cv = jnp.cos(w_ref[pl.ds(r0, chunk_rows), :]
                             * phi_ref[pl.ds(r0, chunk_rows), :])
                if use_mask:
                    cv = jnp.where(flat_iota < (valid - r0 * _LANES), cv, 0.0)
                return acc + cv

            unroll = 2 if num_chunks % 2 == 0 and num_chunks >= 2 else 1
            chunk_sum = lax.fori_loop(
                0, num_chunks, body,
                jnp.zeros((chunk_rows, _LANES), jnp.float32),
                unroll=unroll)
            # Fold into the lane-dense (1, 8, 128) output slab (VPU adds only;
            # the single cross-lane reduce happens in the wrapper).
            out_ref[...] += jnp.sum(
                chunk_sum.reshape(groups, _SUBLANES, _LANES), axis=0
            ).reshape(1, _SUBLANES, _LANES)

        @pl.when(valid >= block_elems)      # fully valid block: no masking
        def _():
            accumulate(False)

        @pl.when(valid < block_elems)       # tail / overhang block: masked
        def _():
            accumulate(True)

    return kernel


def quantum_sum_block(phi_vals: jax.Array,
                      weights: jax.Array,
                      *,
                      use_pallas: bool | None = None,
                      max_block_rows: int = _MAX_BLOCK_ROWS,
                      num_parts: int | None = None) -> jax.Array:
    """JAX/Pallas equivalent of QuantumSumBlock.forward(phi_vals).

    phi_vals: (N,) float32 polynomial outputs
    weights:  (N,) float32 (the nn.Parameter of the torch module)
    returns:  scalar float32
    """
    n = int(phi_vals.shape[0])
    assert weights.shape == (n,)
    num_index_qubits = math.ceil(math.log2(n))
    num_index_states = 2 ** num_index_qubits
    inv_states = 1.0 / float(num_index_states)
    correction = float(num_index_states - n)   # missing index states -> cos(0)=1

    phi = phi_vals.astype(jnp.float32)
    w = weights.astype(jnp.float32)

    if use_pallas is None:
        use_pallas = n >= _PALLAS_MIN_N
    if not use_pallas:
        # Tiny-N fast path: fixed pallas_call overhead dwarfs the work.
        return (jnp.sum(jnp.cos(w * phi)) + correction) * inv_states

    # Sublane-aligned logical 2-D view (rows, 128).
    rows = _round_up(_cdiv(n, _LANES), _SUBLANES)
    padded = rows * _LANES
    if padded == n:
        # Free bitcast: zero extra HBM traffic (N % 1024 == 0).
        phi2d = phi.reshape(rows, _LANES)
        w2d = w.reshape(rows, _LANES)
    else:
        # TODO(synk): residual single pad copy when N % 1024 != 0.
        phi2d = jnp.pad(phi, (0, padded - n)).reshape(rows, _LANES)
        w2d = jnp.pad(w, (0, padded - n)).reshape(rows, _LANES)

    # Block / chunk / partition geometry (all static).
    cap = max(_SUBLANES, (max_block_rows // _SUBLANES) * _SUBLANES)
    block_rows = min(cap, rows)                       # multiple of 8, <= rows
    chunk_rows = 32 if block_rows % 32 == 0 else _SUBLANES
    block_elems = block_rows * _LANES
    num_blocks = _cdiv(rows, block_rows)
    if num_parts is None:
        num_parts = 2 if num_blocks >= 2 else 1       # both TCs on v7x; harmless elsewhere
    num_parts = max(1, min(num_parts, num_blocks))
    blocks_per_part = _cdiv(num_blocks, num_parts)

    kernel = _make_qsum_kernel(block_rows, chunk_rows, block_elems,
                               blocks_per_part, n)

    def in_map(p, i):
        # Clamp so overhang steps of the short partition stay in-bounds; their
        # contribution is masked to zero inside the kernel.
        return (jnp.minimum(p * blocks_per_part + i, num_blocks - 1), 0)

    partials = pl.pallas_call(
        kernel,
        out_shape=jax.ShapeDtypeStruct((num_parts, _SUBLANES, _LANES),
                                       jnp.float32),
        grid=(num_parts, blocks_per_part),
        in_specs=[
            pl.BlockSpec((block_rows, _LANES), in_map),
            pl.BlockSpec((block_rows, _LANES), in_map),
        ],
        out_specs=pl.BlockSpec((1, _SUBLANES, _LANES), lambda p, i: (p, 0, 0)),
        compiler_params=pltpu.CompilerParams(
            dimension_semantics=("parallel", "arbitrary")),
        cost_estimate=pl.CostEstimate(
            flops=3 * n,
            transcendentals=n,
            bytes_accessed=2 * 4 * padded + num_parts * _SUBLANES * _LANES * 4),
    )(phi2d, w2d)

    # Tiny two-level finish: cross-partition + cross-lane reduce in the wrapper.
    return (jnp.sum(partials) + correction) * inv_states


def _reference(phi_vals: jax.Array, weights: jax.Array) -> jax.Array:
    n = phi_vals.shape[0]
    k = math.ceil(math.log2(n))
    return (jnp.sum(jnp.cos(weights * phi_vals)) + (2 ** k - n)) / (2 ** k)


if __name__ == "__main__":
    key = jax.random.PRNGKey(0)
    k1, k2, k3, k4, k5, k6 = jax.random.split(key, 6)

    # 1) Module-sized case: N = 10 polynomials (4 index qubits, 16 states).
    #    Pallas path forced so the kernel itself is exercised at tiny N.
    n1 = 10
    phi1 = jax.random.normal(k1, (n1,), dtype=jnp.float32)
    w1 = jax.random.normal(k2, (n1,), dtype=jnp.float32)
    r1 = jax.block_until_ready(quantum_sum_block(phi1, w1, use_pallas=True))
    ref1 = _reference(phi1, w1)
    assert jnp.allclose(r1, ref1, atol=1e-5, rtol=1e-5), (r1, ref1)

    # 2) Non-128-aligned N with a small block cap: multi-block grid, two
    #    partitions, overhang step and in-kernel tail masking all exercised.
    n2 = 5000
    phi2 = jax.random.normal(k3, (n2,), dtype=jnp.float32)
    w2 = jax.random.normal(k4, (n2,), dtype=jnp.float32)
    r2 = jax.block_until_ready(
        quantum_sum_block(phi2, w2, use_pallas=True, max_block_rows=8))
    ref2 = _reference(phi2, w2)
    assert jnp.allclose(r2, ref2, atol=1e-5, rtol=1e-5), (r2, ref2)

    # 3) 1024-aligned N: zero-copy reshape path, multi-block, both partitions.
    n3 = 128 * 1024
    phi3 = jax.random.normal(k5, (n3,), dtype=jnp.float32)
    w3 = jax.random.normal(k6, (n3,), dtype=jnp.float32)
    r3 = jax.block_until_ready(
        quantum_sum_block(phi3, w3, use_pallas=True, max_block_rows=256))
    ref3 = _reference(phi3, w3)
    assert jnp.allclose(r3, ref3, atol=1e-5, rtol=1e-5), (r3, ref3)

    print("KERNEL_OK")
</pallas_src>

<mosaic_0001>
module attributes {stable_mosaic.version = 11 : i64} {
  func.func @kernel(%arg0: i32, %arg1: i32, %arg2: memref<8x128xf32, #tpu.memory_space<vmem>>, %arg3: memref<8x128xf32, #tpu.memory_space<vmem>>, %arg4: memref<1x8x128xf32, #tpu.memory_space<vmem>>) attributes {dimension_semantics = [#tpu.dimension_semantics<parallel>, #tpu.dimension_semantics<arbitrary>], iteration_bounds = array<i64: 1, 1>, scalar_prefetch = 0 : i64, scratch_operands = 0 : i64, tpu.core_type = #tpu.core_type<tc>, window_params = [{transform_indices = @transform_0, window_bounds = array<i64: 8, 128>}, {transform_indices = @transform_1, window_bounds = array<i64: 8, 128>}, {transform_indices = @transform_2, window_bounds = array<i64: 1, 8, 128>}]} {
    %c0_i32 = arith.constant 0 : i32
    %0 = arith.cmpi eq, %arg1, %c0_i32 : i32
    %1 = arith.extui %0 : i1 to i32
    %c0_i32_0 = arith.constant 0 : i32
    %2 = arith.cmpi ne, %1, %c0_i32_0 : i32
    scf.if %2 {
      %cst = arith.constant 0.000000e+00 : f32
      %18 = vector.broadcast %cst : f32 to vector<1x8x128xf32>
      %c0 = arith.constant 0 : index
      %c0_5 = arith.constant 0 : index
      %c0_6 = arith.constant 0 : index
      %19 = vector.load %arg4[%c0, %c0_5, %c0_6] : memref<1x8x128xf32, #tpu.memory_space<vmem>>, vector<1x8x128xf32>
      tpu.vector_store %arg4[%c0, %c0_5, %c0_6], %18 {strides = array<i32>} : memref<1x8x128xf32, #tpu.memory_space<vmem>>, vector<1x8x128xf32>,
    } else {
    }
    %c1_i32 = arith.constant 1 : i32
    %3 = arith.muli %arg0, %c1_i32 : i32
    %4 = arith.addi %3, %arg1 : i32
    %c1024_i32 = arith.constant 1024 : i32
    %5 = arith.muli %4, %c1024_i32 : i32
    %c10_i32 = arith.constant 10 : i32
    %6 = arith.subi %c10_i32, %5 : i32
    %7 = tpu.iota {dimensions = array<i32: 0>} : vector<8x128xi32>
    %c128_i32 = arith.constant 128 : i32
    %8 = vector.broadcast %c128_i32 : i32 to vector<8x128xi32>
    %9 = arith.muli %7, %8 : vector<8x128xi32>
    %10 = tpu.iota {dimensions = array<i32: 1>} : vector<8x128xi32>
    %11 = arith.addi %9, %10 : vector<8x128xi32>
    %c1024_i32_1 = arith.constant 1024 : i32
    %12 = arith.cmpi sge, %6, %c1024_i32_1 : i32
    %13 = arith.extui %12 : i1 to i32
    %c0_i32_2 = arith.constant 0 : i32
    %14 = arith.cmpi ne, %13, %c0_i32_2 : i32
    scf.if %14 {
      %cst = arith.constant 0.000000e+00 : f32
      %18 = vector.broadcast %cst : f32 to vector<8x128xf32>
      %c0_i32_5 = arith.constant 0 : i32
      %c8_i32 = arith.constant 8 : i32
      %19 = arith.muli %c0_i32_5, %c8_i32 : i32
      %20 = tpu.assume_multiple %19, 8 : i32
      %21 = arith.index_cast %20 : i32 to index
      %c0 = arith.constant 0 : index
      %22 = vector.load %arg3[%21, %c0] : memref<8x128xf32, #tpu.memory_space<vmem>>, vector<8x128xf32>
      %23 = arith.index_cast %20 : i32 to index
      %c0_6 = arith.constant 0 : index
      %24 = vector.load %arg2[%23, %c0_6] : memref<8x128xf32, #tpu.memory_space<vmem>>, vector<8x128xf32>
      %25 = arith.mulf %22, %24 : vector<8x128xf32>
      %26 = math.cos %25 : vector<8x128xf32>
      %27 = arith.addf %18, %26 : vector<8x128xf32>
      %c1_i32_7 = arith.constant 1 : i32
      %c0_8 = arith.constant 0 : index
      %c0_9 = arith.constant 0 : index
      %c0_10 = arith.constant 0 : index
      %28 = vector.load %arg4[%c0_8, %c0_9, %c0_10] : memref<1x8x128xf32, #tpu.memory_space<vmem>>, vector<1x8x128xf32>
      %29 = vector.shape_cast %27 : vector<8x128xf32> to vector<1x8x128xf32>
      %cst_11 = arith.constant dense<0.000000e+00> : vector<8x128xf32>
      %30 = vector.multi_reduction <add>, %29, %cst_11 [0] : vector<1x8x128xf32> to vector<8x128xf32>
      %31 = vector.shape_cast %30 : vector<8x128xf32> to vector<1x8x128xf32>
      %32 = arith.addf %28, %31 : vector<1x8x128xf32>
      %c0_12 = arith.constant 0 : index
      %c0_13 = arith.constant 0 : index
      %c0_14 = arith.constant 0 : index
      %33 = vector.load %arg4[%c0_12, %c0_13, %c0_14] : memref<1x8x128xf32, #tpu.memory_space<vmem>>, vector<1x8x128xf32>
      tpu.vector_store %arg4[%c0_12, %c0_13, %c0_14], %32 {strides = array<i32>} : memref<1x8x128xf32, #tpu.memory_space<vmem>>, vector<1x8x128xf32>,
    } else {
    }
    %c1024_i32_3 = arith.constant 1024 : i32
    %15 = arith.cmpi slt, %6, %c1024_i32_3 : i32
    %16 = arith.extui %15 : i1 to i32
    %c0_i32_4 = arith.constant 0 : i32
    %17 = arith.cmpi ne, %16, %c0_i32_4 : i32
    scf.if %17 {
      %cst = arith.constant 0.000000e+00 : f32
      %18 = vector.broadcast %cst : f32 to vector<8x128xf32>
      %c0_i32_5 = arith.constant 0 : i32
      %c8_i32 = arith.constant 8 : i32
      %19 = arith.muli %c0_i32_5, %c8_i32 : i32
      %20 = tpu.assume_multiple %19, 8 : i32
      %21 = arith.index_cast %20 : i32 to index
      %c0 = arith.constant 0 : index
      %22 = vector.load %arg3[%21, %c0] : memref<8x128xf32, #tpu.memory_space<vmem>>, vector<8x128xf32>
      %23 = arith.index_cast %20 : i32 to index
      %c0_6 = arith.constant 0 : index
      %24 = vector.load %arg2[%23, %c0_6] : memref<8x128xf32, #tpu.memory_space<vmem>>, vector<8x128xf32>
      %25 = arith.mulf %22, %24 : vector<8x128xf32>
      %26 = math.cos %25 : vector<8x128xf32>
      %c128_i32_7 = arith.constant 128 : i32
      %27 = arith.muli %20, %c128_i32_7 : i32
      %28 = arith.subi %6, %27 : i32
      %29 = vector.broadcast %28 : i32 to vector<8x128xi32>
      %30 = arith.cmpi slt, %11, %29 : vector<8x128xi32>
      %cst_8 = arith.constant 0.000000e+00 : f32
      %31 = vector.broadcast %cst_8 : f32 to vector<8x128xf32>
      %32 = arith.select %30, %26, %31 : vector<8x128xi1>, vector<8x128xf32>
      %33 = arith.addf %18, %32 : vector<8x128xf32>
      %c1_i32_9 = arith.constant 1 : i32
      %c0_10 = arith.constant 0 : index
      %c0_11 = arith.constant 0 : index
      %c0_12 = arith.constant 0 : index
      %34 = vector.load %arg4[%c0_10, %c0_11, %c0_12] : memref<1x8x128xf32, #tpu.memory_space<vmem>>, vector<1x8x128xf32>
      %35 = vector.shape_cast %33 : vector<8x128xf32> to vector<1x8x128xf32>
      %cst_13 = arith.constant dense<0.000000e+00> : vector<8x128xf32>
      %36 = vector.multi_reduction <add>, %35, %cst_13 [0] : vector<1x8x128xf32> to vector<8x128xf32>
      %37 = vector.shape_cast %36 : vector<8x128xf32> to vector<1x8x128xf32>
      %38 = arith.addf %34, %37 : vector<1x8x128xf32>
      %c0_14 = arith.constant 0 : index
      %c0_15 = arith.constant 0 : index
      %c0_16 = arith.constant 0 : index
      %39 = vector.load %arg4[%c0_14, %c0_15, %c0_16] : memref<1x8x128xf32, #tpu.memory_space<vmem>>, vector<1x8x128xf32>
      tpu.vector_store %arg4[%c0_14, %c0_15, %c0_16], %38 {strides = array<i32>} : memref<1x8x128xf32, #tpu.memory_space<vmem>>, vector<1x8x128xf32>,
    } else {
    }
    return
  }
  func.func @transform_0(%arg0: i32, %arg1: i32) -> (i32, i32) {
    %c1_i32 = arith.constant 1 : i32
    %0 = arith.muli %arg0, %c1_i32 : i32
    %1 = arith.addi %0, %arg1 : i32
    %c0_i32 = arith.constant 0 : i32
    %2 = arith.minsi %1, %c0_i32 : i32
    %c0_i32_0 = arith.constant 0 : i32
    %c0_i32_1 = arith.constant 0 : i32
    return %2, %c0_i32_0 : i32, i32
  }
  func.func @transform_1(%arg0: i32, %arg1: i32) -> (i32, i32) {
    %c1_i32 = arith.constant 1 : i32
    %0 = arith.muli %arg0, %c1_i32 : i32
    %1 = arith.addi %0, %arg1 : i32
    %c0_i32 = arith.constant 0 : i32
    %2 = arith.minsi %1, %c0_i32 : i32
    %c0_i32_0 = arith.constant 0 : i32
    %c0_i32_1 = arith.constant 0 : i32
    return %2, %c0_i32_0 : i32, i32
  }
  func.func @transform_2(%arg0: i32, %arg1: i32) -> (i32, i32, i32) {
    %c0_i32 = arith.constant 0 : i32
    %c0_i32_0 = arith.constant 0 : i32
    %c0_i32_1 = arith.constant 0 : i32
    return %arg0, %c0_i32, %c0_i32_0 : i32, i32, i32
  }
}

</mosaic_0001>

<llo_original>
// kernel: tpu_custom_call.1
$region0: #{tpu_custom_call.1}
  #allocation0 [shape = 'u32[]', space=smem, size = 0x4, offset = 0x4, fixed_abs, tag = 'smem constant byte address 0x4 - core index']
  #allocation1 [shape = 'u32[144,128]{1,0:T(1,128)}', space=vmem, size = 0x12000, scoped, tag = 'internal scratch']
  %s0 = inlined_call_operand.hbm [shape: f32[8,128], index: 0, kind: input, shape index: {}]
  %s1 = inlined_call_operand.hbm [shape: f32[8,128], index: 1, kind: input, shape index: {}]
  %s2 = inlined_call_operand.hbm [shape: f32[1,8,128], index: 2, kind: output, shape index: {}]
  %s3 = sld [smem:[#allocation0]]
  $region38: #{tpu_custom_call.1} parent=0
    _
  %s5 = ssub.s32 1, %s3
  %s6 = scalar_select 0, %s5, %s3
  $region1: #{tpu_custom_call.1} parent=0
    #allocation2 [shape = 'u8[4096]{0}', space=vmem, size = 0x1000, scoped, tag = 'input window, operand 0, single buffered']
    #allocation3 [shape = 's32[1]{0}', space=sflag, size = 0x4, scoped, tag = 'scoped memory for tpu_custom_call.1']
    #allocation4 [shape = 's32[1]{0}', space=sflag, size = 0x4, scoped, tag = 'scoped memory for tpu_custom_call.1']
    #allocation5 [shape = 'u8[4096]{0}', space=vmem, size = 0x1000, scoped, tag = 'input window, operand 1, single buffered']
    #allocation6 [shape = 's32[1]{0}', space=sflag, size = 0x4, scoped, tag = 'scoped memory for tpu_custom_call.1']
    #allocation7 [shape = 'u8[4096]{0}', space=vmem, size = 0x1000, scoped, tag = 'output window, operand 0, single buffered']
    %7 = vsyncpa [#allocation3], 0
    %8 = vsyncpa [#allocation6], 0
    %9 = vsyncpa [#allocation4], 0
    // Predicated region
    $region2: #{tpu_custom_call.1} parent=1 // pred_check
      _
    $region3: #{tpu_custom_call.1} parent=1 // pred_check_branch
      %11 = sbr.rel (0) target = $region5
    $region4: #{tpu_custom_call.1} parent=1 // pred_region
      %s12 = sadd.s32 0, 0
      %p13 = scmp.lt.s32.totalorder %s12, 0
      %s14 = scalar_select %p13, %s12, 0
      %s16 = ssub.s32 128, 128
      %17 = vsyncadd [#allocation3], %s16
      %s18 = smul.addr %s14, 128
      %s19 = scalar_lea.hbm %s0, %s18
      %s21 = sshll.u32 [#allocation2], 4
      %s22 = int_to_ptr.vmem [resolvable:$true] %s21
      %24 = dma.hbm_to_vmem [thread:$0]  %s19, 128, %s22, [#allocation3]
    $region5: #{tpu_custom_call.1} parent=1 // pred_fallthru
      _
    // Predicated region
    $region6: #{tpu_custom_call.1} parent=1 // pred_check
      _
    $region7: #{tpu_custom_call.1} parent=1 // pred_check_branch
      %26 = sbr.rel (0) target = $region9
    $region8: #{tpu_custom_call.1} parent=1 // pred_region
      %s27 = sadd.s32 0, 0
      %p28 = scmp.lt.s32.totalorder %s27, 0
      %s29 = scalar_select %p28, %s27, 0
      %s31 = ssub.s32 128, 128
      %32 = vsyncadd [#allocation6], %s31
      %s33 = smul.addr %s29, 128
      %s34 = scalar_lea.hbm %s1, %s33
      %s36 = sshll.u32 [#allocation5], 4
      %s37 = int_to_ptr.vmem [resolvable:$true] %s36
      %39 = dma.hbm_to_vmem [thread:$0]  %s34, 128, %s37, [#allocation6]
    $region9: #{tpu_custom_call.1} parent=1 // pred_fallthru
      _
    // Predicated region
    $region10: #{tpu_custom_call.1} parent=1 // pred_check
      _
    $region11: #{tpu_custom_call.1} parent=1 // pred_check_branch
      %41 = sbr.rel (0) target = $region13
    $region12: #{tpu_custom_call.1} parent=1 // pred_region
      %42 = dma.done [#allocation3], 128
    $region13: #{tpu_custom_call.1} parent=1 // pred_fallthru
      _
    // Predicated region
    $region14: #{tpu_custom_call.1} parent=1 // pred_check
      _
    $region15: #{tpu_custom_call.1} parent=1 // pred_check_branch
      %44 = sbr.rel (0) target = $region17
    $region16: #{tpu_custom_call.1} parent=1 // pred_region
      %45 = dma.done [#allocation6], 128
    $region17: #{tpu_custom_call.1} parent=1 // pred_fallthru
      _
    %s46 = sadd.s32 0, 0
    %p47 = scmp.lt.s32.totalorder %s46, 0
    %s48 = scalar_select %p47, %s46, 0
    %s49 = sadd.s32 0, 0
    %p50 = scmp.lt.s32.totalorder %s49, 0
    %s51 = scalar_select %p50, %s49, 0
    %p52 = scmp.eq.s32.totalorder 0, 0
    // Predicated region
    $region18: #{tpu_custom_call.1} parent=1 // pred_check
      %p53 = pneg %p52
    $region19: #{tpu_custom_call.1} parent=1 // pred_check_branch
      %55 = sbr.rel (%p53) target = $region21
    $region20: #{tpu_custom_call.1} parent=1 // pred_region
      %56 = vst [vmem:[#allocation7] sm:$0xff] 0.0
    $region21: #{tpu_custom_call.1} parent=1 // pred_fallthru
      _
    %s57 = sadd.s32 0, 0
    %s58 = smul.u32 %s57, 1024
    %s59 = ssub.s32 10, %s58
    %v60 = vlaneseq
    %v61 = vshrl.u32 %v60, 7
    %v62 = vmul.u32 %v61, 128
    %v63 = vlaneseq
    %v64 = vand.u32 %v63, 127
    %v65 = vadd.s32 %v62, %v64
    %p66 = scmp.ge.s32.totalorder %s59, 1024
    // Predicated region
    $region22: #{tpu_custom_call.1} parent=1 // pred_check
      %p67 = pneg %p66
    $region23: #{tpu_custom_call.1} parent=1 // pred_check_branch
      %69 = sbr.rel (%p67) target = $region25
    $region24: #{tpu_custom_call.1} parent=1 // pred_region
      %v70 = vld [vmem:[#allocation5] sm:$0xff]
      %v71 = vld [vmem:[#allocation2] sm:$0xff]
      %v72 = vmul.f32 %v70, %v71
      %v73 = vand.u32 2147483647, %v72
      %vm74 = vcmp.le.f32.partialorder %v73, 0.7853982
      %vm75 = vcmp.lt.s32.totalorder %v72, 0
      %v76 = vand.u32 %v72, 2139095040
      %v77 = vshrl.u32 %v76, 23
      %v78 = vsub.s32 %v77, 127
      %v79 = vand.u32 2147483647, %v72
      %v80 = vand.u32 %v79, 8388607
      %v81 = vor.u32 %v80, 8388608
      %v82 = vsub.s32 0, %v81
      %v83 = vadd.s32 %v78, 1
      %vm84 = vcmp.gt.s32.totalorder %v83, 0
      %v85 = vsel %vm84, %v83, 0
      %v86 = vshrl.u32 %v85, 5
      %v87 = vand.u32 %v85, 31
      %v88 = vsub.s32 32, %v87
      %v89 = vshrl.u32 683565275, %v88
      %v90 = vshll.u32 683565275, %v87
      %v91 = vshrl.u32 2475754826, %v88
      %v92 = vor.u32 %v90, %v91
      %v93 = vshll.u32 2475754826, %v87
      %v94 = vshrl.u32 2131351028, %v88
      %v95 = vor.u32 %v93, %v94
      %v96 = vshll.u32 2131351028, %v87
      %v97 = vshrl.u32 2102212464, %v88
      %v98 = vor.u32 %v96, %v97
      %v99 = vshll.u32 2102212464, %v87
      %v100 = vshrl.u32 920167782, %v88
      %v101 = vor.u32 %v99, %v100
      %v102 = vshll.u32 920167782, %v87
      %v103 = vshrl.u32 1326507024, %v88
      %v104 = vor.u32 %v102, %v103
      %vm105 = vcmp.lt.s32.totalorder %v86, 1
      %vm106 = vcmp.lt.s32.totalorder %v86, 2
      %vm107 = vcmp.lt.s32.totalorder %v86, 3
      %vm108 = vcmp.lt.s32.totalorder %v86, 4
      %v109 = vsel %vm105, %v89, %v92
      %v110 = vsel %vm108, %v98, 2102212464
      %v111 = vsel %vm107, %v95, %v110
      %v112 = vsel %vm106, %v109, %v111
      %v113 = vsel %vm105, %v92, %v95
      %v114 = vsel %vm108, %v101, 920167782
      %v115 = vsel %vm107, %v98, %v114
      %v116 = vsel %vm106, %v113, %v115
      %v117 = vsel %vm105, %v95, %v98
      %v118 = vsel %vm108, %v104, 1326507024
      %v119 = vsel %vm107, %v101, %v118
      %v120 = vsel %vm106, %v117, %v119
      %v121 = vshll.u32 %v81, 8
      %v122 = vmul.u32.u64.compose %v121, %v120
      %v123 = vextract.low.u32 %v122
      %v124 = vextract.high.u32 %v122
      %v125 = vmul.u32.u64.compose %v121, %v116
      %v126 = vextract.low.u32 %v125
      %v127 = vextract.high.u32 %v125
      %v128 = vmul.u32 %v121, %v112
      %v129 = vadd.s32 %v124, %v126
      %vm130 = vc.u32 %v124, %v126
      %v131 = vadd.s32 %v127, 1
      %v132 = vsel %vm130, %v131, %v127
      %v133 = vadd.s32 %v128, %v132
      %v134 = vadd.s32 %v133, 536870912
      %v135 = vshrl.u32 %v134, 30
      %v136 = vshll.u32 %v135, 30
      %v137 = vsub.s32 %v133, %v136
      %vm138 = vcmp.lt.s32.totalorder %v137, 0
      %v139 = vsub.s32 0, %v137
      %v140 = vsel %vm138, %v139, %v137
      %v141 = vclz %v140
      %v142 = vsub.s32 %v141, 2
      %vm143 = vcmp.gt.s32.totalorder 0, %v142
      %v144 = vsel %vm143, 0, %v142
      %v145 = vsub.s32 32, %v144
      %v146 = vshll.u32 %v137, %v144
      %v147 = vshrl.u32 %v129, %v145
      %v148 = vor.u32 %v146, %v147
      %v149 = vsub.s32 4294967266, %v144
      %v150 = vadd.s32 %v149, 127
      %v151 = vshll.u32 %v150, 23
      %v152 = vor.u32 4788187, %v151
      %v153 = vand.u32 2147483647, %v152
      %v155 = vcvt.s32.f32 %v148
      %v156 = vmul.f32 %v155, %v153
      %v157 = vxor.u32 %v156, 2147483648
      %v158 = vsel %vm75, %v157, %v156
      %v159 = vsub.s32 4, %v135
      %v160 = vsel %vm75, %v159, %v135
      %v161 = vsel %vm74, %v72, %v158
      %v162 = vsel %vm74, 0, %v160
      %v163 = vcosq.f32.pop %v161
      %v164 = vsinq.f32.pop %v161
      %vm165 = vweird.f32 %v72
      %v166 = vand.u32 %v162, 3
      %vm167 = vcmp.lt.s32.totalorder %v166, 2
      %vm168 = vcmp.eq.s32.totalorder %v166, 0
      %v169 = vxor.u32 %v164, 2147483648
      %v170 = vsel %vm168, %v163, %v169
      %vm171 = vcmp.eq.s32.totalorder %v166, 2
      %v172 = vxor.u32 %v163, 2147483648
      %v173 = vsel %vm171, %v172, %v164
      %v174 = vsel %vm167, %v170, %v173
      %v175 = vsel %vm165, nan, %v174
      %v176 = vadd.f32 %v175, 0.0
      %v177 = vld [vmem:[#allocation7] sm:$0xff]
      %v178 = vadd.f32 %v176, 0.0
      %v179 = vadd.f32 %v177, %v178
      %180 = vst [vmem:[#allocation7] sm:$0xff] %v179
    $region25: #{tpu_custom_call.1} parent=1 // pred_fallthru
      _
    %p181 = scmp.lt.s32.totalorder %s59, 1024
    // Predicated region
    $region26: #{tpu_custom_call.1} parent=1 // pred_check
      %p182 = pneg %p181
    $region27: #{tpu_custom_call.1} parent=1 // pred_check_branch
      %184 = sbr.rel (%p182) target = $region29
    $region28: #{tpu_custom_call.1} parent=1 // pred_region
      %v185 = vld [vmem:[#allocation5] sm:$0xff]
      %v186 = vld [vmem:[#allocation2] sm:$0xff]
      %v187 = vmul.f32 %v185, %v186
      %v188 = vand.u32 2147483647, %v187
      %vm189 = vcmp.le.f32.partialorder %v188, 0.7853982
      %vm190 = vcmp.lt.s32.totalorder %v187, 0
      %v191 = vand.u32 %v187, 2139095040
      %v192 = vshrl.u32 %v191, 23
      %v193 = vsub.s32 %v192, 127
      %v194 = vand.u32 2147483647, %v187
      %v195 = vand.u32 %v194, 8388607
      %v196 = vor.u32 %v195, 8388608
      %v197 = vsub.s32 0, %v196
      %v198 = vadd.s32 %v193, 1
      %vm199 = vcmp.gt.s32.totalorder %v198, 0
      %v200 = vsel %vm199, %v198, 0
      %v201 = vshrl.u32 %v200, 5
      %v202 = vand.u32 %v200, 31
      %v203 = vsub.s32 32, %v202
      %v204 = vshrl.u32 683565275, %v203
      %v205 = vshll.u32 683565275, %v202
      %v206 = vshrl.u32 2475754826, %v203
      %v207 = vor.u32 %v205, %v206
      %v208 = vshll.u32 2475754826, %v202
      %v209 = vshrl.u32 2131351028, %v203
      %v210 = vor.u32 %v208, %v209
      %v211 = vshll.u32 2131351028, %v202
      %v212 = vshrl.u32 2102212464, %v203
      %v213 = vor.u32 %v211, %v212
      %v214 = vshll.u32 2102212464, %v202
      %v215 = vshrl.u32 920167782, %v203
      %v216 = vor.u32 %v214, %v215
      %v217 = vshll.u32 920167782, %v202
      %v218 = vshrl.u32 1326507024, %v203
      %v219 = vor.u32 %v217, %v218
      %vm220 = vcmp.lt.s32.totalorder %v201, 1
      %vm221 = vcmp.lt.s32.totalorder %v201, 2
      %vm222 = vcmp.lt.s32.totalorder %v201, 3
      %vm223 = vcmp.lt.s32.totalorder %v201, 4
      %v224 = vsel %vm220, %v204, %v207
      %v225 = vsel %vm223, %v213, 2102212464
      %v226 = vsel %vm222, %v210, %v225
      %v227 = vsel %vm221, %v224, %v226
      %v228 = vsel %vm220, %v207, %v210
      %v229 = vsel %vm223, %v216, 920167782
      %v230 = vsel %vm222, %v213, %v229
      %v231 = vsel %vm221, %v228, %v230
      %v232 = vsel %vm220, %v210, %v213
      %v233 = vsel %vm223, %v219, 1326507024
      %v234 = vsel %vm222, %v216, %v233
      %v235 = vsel %vm221, %v232, %v234
      %v236 = vshll.u32 %v196, 8
      %v237 = vmul.u32.u64.compose %v236, %v235
      %v238 = vextract.low.u32 %v237
      %v239 = vextract.high.u32 %v237
      %v240 = vmul.u32.u64.compose %v236, %v231
      %v241 = vextract.low.u32 %v240
      %v242 = vextract.high.u32 %v240
      %v243 = vmul.u32 %v236, %v227
      %v244 = vadd.s32 %v239, %v241
      %vm245 = vc.u32 %v239, %v241
      %v246 = vadd.s32 %v242, 1
      %v247 = vsel %vm245, %v246, %v242
      %v248 = vadd.s32 %v243, %v247
      %v249 = vadd.s32 %v248, 536870912
      %v250 = vshrl.u32 %v249, 30
      %v251 = vshll.u32 %v250, 30
      %v252 = vsub.s32 %v248, %v251
      %vm253 = vcmp.lt.s32.totalorder %v252, 0
      %v254 = vsub.s32 0, %v252
      %v255 = vsel %vm253, %v254, %v252
      %v256 = vclz %v255
      %v257 = vsub.s32 %v256, 2
      %vm258 = vcmp.gt.s32.totalorder 0, %v257
      %v259 = vsel %vm258, 0, %v257
      %v260 = vsub.s32 32, %v259
      %v261 = vshll.u32 %v252, %v259
      %v262 = vshrl.u32 %v244, %v260
      %v263 = vor.u32 %v261, %v262
      %v264 = vsub.s32 4294967266, %v259
      %v265 = vadd.s32 %v264, 127
      %v266 = vshll.u32 %v265, 23
      %v267 = vor.u32 4788187, %v266
      %v268 = vand.u32 2147483647, %v267
      %v270 = vcvt.s32.f32 %v263
      %v271 = vmul.f32 %v270, %v268
      %v272 = vxor.u32 %v271, 2147483648
      %v273 = vsel %vm190, %v272, %v271
      %v274 = vsub.s32 4, %v250
      %v275 = vsel %vm190, %v274, %v250
      %v276 = vsel %vm189, %v187, %v273
      %v277 = vsel %vm189, 0, %v275
      %v278 = vcosq.f32.pop %v276
      %v279 = vsinq.f32.pop %v276
      %vm280 = vweird.f32 %v187
      %v281 = vand.u32 %v277, 3
      %vm282 = vcmp.lt.s32.totalorder %v281, 2
      %vm283 = vcmp.eq.s32.totalorder %v281, 0
      %v284 = vxor.u32 %v279, 2147483648
      %v285 = vsel %vm283, %v278, %v284
      %vm286 = vcmp.eq.s32.totalorder %v281, 2
      %v287 = vxor.u32 %v278, 2147483648
      %v288 = vsel %vm286, %v287, %v279
      %v289 = vsel %vm282, %v285, %v288
      %v290 = vsel %vm280, nan, %v289
      %s291 = smul.u32 0, 128
      %s292 = ssub.s32 %s59, %s291
      %v293 = vstv %s292
      %vm294 = vcmp.lt.s32.totalorder %v65, %v293
      %v295 = vsel %vm294, %v290, 0.0
      %v296 = vadd.f32 %v295, 0.0
      %v297 = vld [vmem:[#allocation7] sm:$0xff]
      %v298 = vadd.f32 %v296, 0.0
      %v299 = vadd.f32 %v297, %v298
      %300 = vst [vmem:[#allocation7] sm:$0xff] %v299
    $region29: #{tpu_custom_call.1} parent=1 // pred_fallthru
      _
    // Predicated region
    $region30: #{tpu_custom_call.1} parent=1 // pred_check
      _
    $region31: #{tpu_custom_call.1} parent=1 // pred_check_branch
      %302 = sbr.rel (0) target = $region33
    $region32: #{tpu_custom_call.1} parent=1 // pred_region
      %s304 = ssub.s32 128, 128
      %305 = vsyncadd [#allocation4], %s304
      %s307 = sshll.u32 [#allocation7], 4
      %s308 = int_to_ptr.vmem [resolvable:$true] %s307
      %310 = dma.vmem_to_hbm [thread:$0]  %s308, 128, %s2, [#allocation4]
    $region33: #{tpu_custom_call.1} parent=1 // pred_fallthru
      _
    // Predicated region
    $region34: #{tpu_custom_call.1} parent=1 // pred_check
      _
    $region35: #{tpu_custom_call.1} parent=1 // pred_check_branch
      %312 = sbr.rel (0) target = $region37
    $region36: #{tpu_custom_call.1} parent=1 // pred_region
      %313 = dma.done [#allocation4], 128
    $region37: #{tpu_custom_call.1} parent=1 // pred_fallthru
      _
    %314 = vsyncpa [#allocation3], 1
    %315 = vsyncpa [#allocation6], 1
    %316 = vsyncpa [#allocation4], 1

</llo_original>
